<compile_context>
chip_gen: v7x
topology: tpu7x:2x2x1
jax: 0.10.0
libtpu: 0.0.40
codegen_flags: <defaults>
</compile_context>

<pallas_src>
import jax
import jax.numpy as jnp
from jax.experimental import pallas as pl
from jax.experimental.pallas import tpu as pltpu


_ROW_ALIGN = 256  # legal sublane multiple for f32 / bf16 / int8 row tiles


def _round_up(n, m):
    return ((n + m - 1) // m) * m


def _round_down(n, m):
    return (n // m) * m


def _classifier_kernel(x_ref, w_ref, b_ref, mask_ref, out_ref):
    # x_ref:    (tm, H)  x.dtype, streamed/pipelined tile (MXU LHS)
    # w_ref:    (H, 1)   x.dtype, VMEM-resident weight column (constant index_map)
    # b_ref:    (1, 1)   f32 scalar in SMEM
    # mask_ref: (tm, 1)  narrow dtype (int8 / int32 / float); cast to f32 in-kernel
    # out_ref:  (tm, 1)  f32
    h = jax.lax.dot_general(
        x_ref[...],
        w_ref[...],
        dimension_numbers=(((1,), (0,)), ((), ())),
        preferred_element_type=jnp.float32,
    )
    h = h + b_ref[0, 0]                                    # f32 epilogue
    out_ref[...] = jax.nn.sigmoid(h) * mask_ref[...].astype(jnp.float32)


def classifier_forward(x, mask_cls, weight, bias, *, block_m=2048,
                       x_vmem_budget_bytes=24 << 20):
    """Pallas equivalent of Classifier.forward.

    x:        (B, S, H) float32 or bfloat16 (kept in its own dtype -- bf16 halves HBM
              traffic on the dominant tensor, the right lever on v5e)
    mask_cls: (B, S)    any dtype (bool/int/float); multiplied in as float, like
              mask_cls.float() in torch
    weight:   (1, H)    nn.Linear(hidden_size, 1).weight
    bias:     (1,)      nn.Linear(hidden_size, 1).bias
    returns:  (B, S)    float32
    """
    B, S, H = x.shape
    M = B * S
    itemsize = jnp.dtype(x.dtype).itemsize

    # ---- Row-tile size: largest multiple of 256 whose double-buffered x slab fits the
    # VMEM budget, capped so both TensorCores get >= 1 tile (v7x megacore) and never
    # larger than the problem.  (For very large H (>= ~8K) a second "arbitrary" grid axis
    # over H with an f32 accumulator would keep tm large; not needed at typical H.)
    tm = min(int(block_m), max(_ROW_ALIGN, x_vmem_budget_bytes // (2 * H * itemsize)))
    half_m = _round_down(M // 2, _ROW_ALIGN)
    if half_m >= _ROW_ALIGN:
        tm = min(tm, half_m)
    tm = max(_ROW_ALIGN, _round_down(tm, _ROW_ALIGN))
    if tm >= M:
        tm = M            # single full-extent block: always a legal block shape
    grid_m = pl.cdiv(M, tm)

    # ---- Operands.  No padding / HBM copy of x: reshape is a view.
    x2 = x.reshape(M, H)
    mask2 = mask_cls
    if mask2.dtype == jnp.bool_:
        mask2 = mask2.astype(jnp.int8)           # narrow HBM stream; f32 cast in-kernel
    mask2 = mask2.reshape(M, 1)
    mask_itemsize = jnp.dtype(mask2.dtype).itemsize
    w2 = weight.reshape(H, 1).astype(x.dtype)    # tiny; match x dtype for MXU-native dot
    b2 = bias.astype(jnp.float32).reshape(1, 1)  # scalar -> SMEM

    # ---- VMEM accounting (lane/sublane padded tiles) -> explicit scoped-VMEM limit.
    x_tile = tm * _round_up(H, 128) * itemsize
    col_tiles = tm * 128 * (4 + mask_itemsize)           # out(f32) + mask column tiles
    w_tile = _round_up(H, 8) * 128 * itemsize
    vmem_needed = 2 * (x_tile + col_tiles) + 2 * w_tile
    vmem_limit = int(min(max(vmem_needed + (2 << 20), 16 << 20), 96 << 20))

    out = pl.pallas_call(
        _classifier_kernel,
        out_shape=jax.ShapeDtypeStruct((M, 1), jnp.float32),
        grid_spec=pltpu.PrefetchScalarGridSpec(
            num_scalar_prefetch=0,
            grid=(grid_m,),
            in_specs=[
                pl.BlockSpec((tm, H), lambda i: (i, 0)),    # x: streamed / pipelined
                pl.BlockSpec((H, 1), lambda i: (0, 0)),     # weight column: resident
                pl.BlockSpec(memory_space=pltpu.SMEM),      # bias scalar
                pl.BlockSpec((tm, 1), lambda i: (i, 0)),    # mask column
            ],
            out_specs=pl.BlockSpec((tm, 1), lambda i: (i, 0)),  # score column
        ),
        compiler_params=pltpu.CompilerParams(
            dimension_semantics=("parallel",),   # independent row tiles -> megacore split
            vmem_limit_bytes=vmem_limit,
        ),
        cost_estimate=pl.CostEstimate(
            flops=2 * M * H,
            transcendentals=M,
            bytes_accessed=M * H * itemsize + M * (4 + mask_itemsize) + H * itemsize,
        ),
    )(x2, w2, b2, mask2)

    return out.reshape(B, S)


def _init_params(hidden_size, key):
    # Deterministic init mimicking nn.Linear(hidden_size, 1) default
    # (uniform in [-1/sqrt(H), 1/sqrt(H)]).
    kw, kb = jax.random.split(key)
    bound = 1.0 / (hidden_size ** 0.5)
    weight = jax.random.uniform(kw, (1, hidden_size), jnp.float32, -bound, bound)
    bias = jax.random.uniform(kb, (1,), jnp.float32, -bound, bound)
    return weight, bias


if __name__ == "__main__":
    key = jax.random.PRNGKey(0)
    k_x, k_m, k_p, k_x2, k_m2, k_p2 = jax.random.split(key, 6)

    # Small shapes implied by the module: batch=2, seq=8, hidden=32.
    B, S, H = 2, 8, 32
    x = jax.random.normal(k_x, (B, S, H), dtype=jnp.float32)
    mask_cls = (jax.random.uniform(k_m, (B, S)) > 0.3).astype(jnp.int32)
    weight, bias = _init_params(H, k_p)

    out = jax.block_until_ready(classifier_forward(x, mask_cls, weight, bias))
    ref = jax.nn.sigmoid(
        jnp.einsum("bsh,h->bs", x, weight.reshape(-1)) + bias[0]
    ) * mask_cls.astype(jnp.float32)
    assert out.shape == (B, S)
    assert jnp.allclose(out, ref, atol=1e-5), "f32 mismatch vs reference"

    # Multi-tile grid with a non-divisible (partial) last block, bool mask, bf16 x.
    B2, S2, H2 = 3, 200, 256          # M = 600 -> tm = 256, grid = 3, last block partial
    xb = jax.random.normal(k_x2, (B2, S2, H2), dtype=jnp.bfloat16)
    maskb = jax.random.uniform(k_m2, (B2, S2)) > 0.5
    wb, bb = _init_params(H2, k_p2)
    outb = jax.block_until_ready(classifier_forward(xb, maskb, wb, bb))
    refb = jax.nn.sigmoid(
        jnp.einsum(
            "bsh,h->bs",
            xb.astype(jnp.float32),
            wb.reshape(-1).astype(jnp.bfloat16).astype(jnp.float32),
        ) + bb[0]
    ) * maskb.astype(jnp.float32)
    assert outb.shape == (B2, S2)
    assert jnp.allclose(outb, refb, atol=3e-2), "bf16 mismatch vs reference"

    print("KERNEL_OK")
</pallas_src>

<mosaic_0001>
module attributes {stable_mosaic.version = 11 : i64} {
  func.func @_classifier_kernel(%arg0: i32, %arg1: memref<16x32xf32, #tpu.memory_space<vmem>>, %arg2: memref<32x1xf32, #tpu.memory_space<vmem>>, %arg3: memref<1x1xf32, #tpu.memory_space<smem>>, %arg4: memref<16x1xi32, #tpu.memory_space<vmem>>, %arg5: memref<16x1xf32, #tpu.memory_space<vmem>>) attributes {dimension_semantics = [#tpu.dimension_semantics<parallel>], iteration_bounds = array<i64: 1>, scalar_prefetch = 0 : i64, scratch_operands = 0 : i64, tpu.core_type = #tpu.core_type<tc>, window_params = [{transform_indices = @transform_0, window_bounds = array<i64: 16, 32>}, {pipeline_mode = #tpu.pipeline_mode<synchronous>, transform_indices = @transform_1, window_bounds = array<i64: 32, 1>}, {transform_indices = @transform_2, window_bounds = array<i64: 1, 1>}, {transform_indices = @transform_3, window_bounds = array<i64: 16, 1>}, {transform_indices = @transform_4, window_bounds = array<i64: 16, 1>}]} {
    %c0 = arith.constant 0 : index
    %c0_0 = arith.constant 0 : index
    %0 = vector.load %arg1[%c0, %c0_0] : memref<16x32xf32, #tpu.memory_space<vmem>>, vector<16x32xf32>
    %c0_1 = arith.constant 0 : index
    %c0_2 = arith.constant 0 : index
    %1 = vector.load %arg2[%c0_1, %c0_2] : memref<32x1xf32, #tpu.memory_space<vmem>>, vector<32x1xf32>
    %cst = arith.constant dense<0.000000e+00> : vector<16x1xf32>
    %2 = tpu.matmul %0, %1, %cst {dimension_numbers = #tpu.dot_dimension_numbers<[1], [0], [0], [1], [0, 0, 1, 1], [], []>} : vector<16x32xf32>, vector<32x1xf32>, vector<16x1xf32> -> vector<16x1xf32>
    %c0_3 = arith.constant 0 : index
    %c0_4 = arith.constant 0 : index
    %3 = memref.load %arg3[%c0_3, %c0_4] : memref<1x1xf32, #tpu.memory_space<smem>>
    %4 = vector.broadcast %3 : f32 to vector<16x1xf32>
    %5 = arith.addf %2, %4 : vector<16x1xf32>
    %6 = arith.negf %5 : vector<16x1xf32>
    %7 = math.exp %6 : vector<16x1xf32>
    %cst_5 = arith.constant 1.000000e+00 : f32
    %8 = vector.broadcast %cst_5 : f32 to vector<16x1xf32>
    %9 = arith.addf %8, %7 : vector<16x1xf32>
    %10 = arith.divf %8, %9 : vector<16x1xf32>
    %c0_6 = arith.constant 0 : index
    %c0_7 = arith.constant 0 : index
    %11 = vector.load %arg4[%c0_6, %c0_7] : memref<16x1xi32, #tpu.memory_space<vmem>>, vector<16x1xi32>
    %12 = arith.sitofp %11 : vector<16x1xi32> to vector<16x1xf32>
    %13 = arith.mulf %10, %12 : vector<16x1xf32>
    %c0_8 = arith.constant 0 : index
    %c0_9 = arith.constant 0 : index
    %14 = vector.load %arg5[%c0_8, %c0_9] : memref<16x1xf32, #tpu.memory_space<vmem>>, vector<16x1xf32>
    tpu.vector_store %arg5[%c0_8, %c0_9], %13 {strides = array<i32>} : memref<16x1xf32, #tpu.memory_space<vmem>>, vector<16x1xf32>,
    return
  }
  func.func @transform_0(%arg0: i32) -> (i32, i32) {
    %c0_i32 = arith.constant 0 : i32
    %c0_i32_0 = arith.constant 0 : i32
    return %arg0, %c0_i32 : i32, i32
  }
  func.func @transform_1(%arg0: i32) -> (i32, i32) {
    %c0_i32 = arith.constant 0 : i32
    %c0_i32_0 = arith.constant 0 : i32
    %c0_i32_1 = arith.constant 0 : i32
    return %c0_i32, %c0_i32_0 : i32, i32
  }
  func.func @transform_2(%arg0: i32) -> (i32, i32) {
    %c0_i32 = arith.constant 0 : i32
    %c0_i32_0 = arith.constant 0 : i32
    %c0_i32_1 = arith.constant 0 : i32
    return %c0_i32, %c0_i32_0 : i32, i32
  }
  func.func @transform_3(%arg0: i32) -> (i32, i32) {
    %c0_i32 = arith.constant 0 : i32
    %c0_i32_0 = arith.constant 0 : i32
    return %arg0, %c0_i32 : i32, i32
  }
  func.func @transform_4(%arg0: i32) -> (i32, i32) {
    %c0_i32 = arith.constant 0 : i32
    %c0_i32_0 = arith.constant 0 : i32
    return %arg0, %c0_i32 : i32, i32
  }
}

</mosaic_0001>

<llo_original>
// kernel: tpu_custom_call.1
$region0: #{tpu_custom_call.1}
  #allocation0 [shape = 'u32[]', space=smem, size = 0x4, offset = 0x4, fixed_abs, tag = 'smem constant byte address 0x4 - core index']
  #allocation1 [shape = 'u32[144,128]{1,0:T(1,128)}', space=vmem, size = 0x12000, scoped, tag = 'internal scratch']
  #allocation2 [shape = 'f32[1,1]{1,0:T(1,128)S(6)}', space=smem, size = 0x200, scoped, tag = 'scoped memory for tpu_custom_call.1']
  %s0 = inlined_call_operand.vmem [shape: f32[16,32], index: 0, kind: input, shape index: {}]
  %s1 = inlined_call_operand.vmem [shape: f32[32,1], index: 1, kind: input, shape index: {}]
  %s2 = inlined_call_operand.<no memory space> [shape: f32[1,1], index: 2, kind: input, shape index: {}]
  %s3 = inlined_call_operand.vmem [shape: s32[16,1], index: 3, kind: input, shape index: {}]
  %s4 = inlined_call_operand.vmem [shape: f32[16,1], index: 4, kind: output, shape index: {}]
  %s5 = sld [smem:[#allocation0]]
  $region26: #{tpu_custom_call.1} parent=0
    _
  %s7 = ssub.s32 1, %s5
  %s8 = scalar_select 0, %s7, %s5
  %9 = sst [smem:[#allocation2]] %s2
  // Predicated region
  $region2: #{tpu_custom_call.1} parent=0 // pred_check
    _
  $region3: #{tpu_custom_call.1} parent=0 // pred_check_branch
    %11 = sbr.rel (0) target = $region5
  $region4: #{tpu_custom_call.1} parent=0 // pred_region
    _
  $region5: #{tpu_custom_call.1} parent=0 // pred_fallthru
    _
  // Predicated region
  $region6: #{tpu_custom_call.1} parent=0 // pred_check
    _
  $region7: #{tpu_custom_call.1} parent=0 // pred_check_branch
    %13 = sbr.rel (0) target = $region9
  $region8: #{tpu_custom_call.1} parent=0 // pred_region
    _
  $region9: #{tpu_custom_call.1} parent=0 // pred_fallthru
    _
  // Predicated region
  $region10: #{tpu_custom_call.1} parent=0 // pred_check
    _
  $region11: #{tpu_custom_call.1} parent=0 // pred_check_branch
    %15 = sbr.rel (0) target = $region13
  $region12: #{tpu_custom_call.1} parent=0 // pred_region
    _
  $region13: #{tpu_custom_call.1} parent=0 // pred_fallthru
    _
  // Predicated region
  $region14: #{tpu_custom_call.1} parent=0 // pred_check
    _
  $region15: #{tpu_custom_call.1} parent=0 // pred_check_branch
    %17 = sbr.rel (0) target = $region17
  $region16: #{tpu_custom_call.1} parent=0 // pred_region
    _
  $region17: #{tpu_custom_call.1} parent=0 // pred_fallthru
    _
  %v18 = vld [vmem:[%s0] sm:$0xff]
  %v19 = vld [vmem:[%s0 + $0x8] sm:$0xff]
  %v20 = vld [vmem:[%s1] sm:$0xff]
  %v21 = vld [vmem:[%s1 + $0x8] sm:$0xff]
  %v22 = vld [vmem:[%s1 + $0x10] sm:$0xff]
  %v23 = vld [vmem:[%s1 + $0x18] sm:$0xff]
  %s24 = sld [smem:[#allocation2]]
  %v25 = vstv %s24
  %vm26 = vcmask 261120
  %v28 = vsel %vm26, %v18, 0
  %v31 = vsel %vm26, %v19, 0
  %33 = vmatprep.subr.mxu0 0.0
  %34 = vmatpush1.msra.mxu0 %v20
  %35 = vmatprep.subr.mxu0 0.0
  %36 = vmatpush1.msra.mxu0 %v21
  %37 = vmatprep.subr.mxu0 0.0
  %38 = vmatpush1.msra.mxu0 %v22
  %39 = vmatprep.subr.mxu0 0.0
  %40 = vmatpush1.msra.mxu0 %v23
  %41 = vmatprep.subr.mxu0 0.0
  %42 = vmatpush1.msra.mxu0 0.0
  %43 = vmatprep.subr.mxu0 0.0
  %44 = vmatpush1.msra.mxu0 0.0
  %45 = vmatprep.subr.mxu0 0.0
  %46 = vmatpush1.msra.mxu0 0.0
  %47 = vmatprep.subr.mxu0 0.0
  %48 = vmatpush1.msra.mxu0 0.0
  %49 = vmatprep.subr.mxu0 0.0
  %50 = vmatpush1.msra.mxu0 0.0
  %51 = vmatprep.subr.mxu0 0.0
  %52 = vmatpush1.msra.mxu0 0.0
  %53 = vmatprep.subr.mxu0 0.0
  %54 = vmatpush1.msra.mxu0 0.0
  %55 = vmatprep.subr.mxu0 0.0
  %56 = vmatpush1.msra.mxu0 0.0
  %57 = vmatprep.subr.mxu0 0.0
  %58 = vmatpush1.msra.mxu0 0.0
  %59 = vmatprep.subr.mxu0 0.0
  %60 = vmatpush1.msra.mxu0 0.0
  %61 = vmatprep.subr.mxu0 0.0
  %62 = vmatpush1.msra.mxu0 0.0
  %63 = vmatprep.subr.mxu0 0.0
  %64 = vmatpush1.msra.mxu0 0.0
  %65 = vmatprep.subr.mxu0 0.0
  %66 = vmatpush1.msra.mxu0 0.0
  %67 = vmatprep.subr.mxu0 0.0
  %68 = vmatpush1.msra.mxu0 0.0
  %69 = vmatprep.subr.mxu0 0.0
  %70 = vmatpush1.msra.mxu0 0.0
  %71 = vmatprep.subr.mxu0 0.0
  %72 = vmatpush1.msra.mxu0 0.0
  %73 = vmatprep.subr.mxu0 0.0
  %74 = vmatpush1.msra.mxu0 0.0
  %75 = vmatprep.subr.mxu0 0.0
  %76 = vmatpush1.msra.mxu0 0.0
  %77 = vmatprep.subr.mxu0 0.0
  %78 = vmatpush1.msra.mxu0 0.0
  %79 = vmatprep.subr.mxu0 0.0
  %80 = vmatpush1.msra.mxu0 0.0
  %81 = vmatprep.subr.mxu0 0.0
  %82 = vmatpush1.msra.mxu0 0.0
  %83 = vmatprep.subr.mxu0 0.0
  %84 = vmatpush1.msra.mxu0 0.0
  %85 = vmatprep.subr.mxu0 0.0
  %86 = vmatpush1.msra.mxu0 0.0
  %87 = vmatprep.subr.mxu0 0.0
  %88 = vmatpush1.msra.mxu0 0.0
  %89 = vmatprep.subr.mxu0 0.0
  %90 = vmatpush1.msra.mxu0 0.0
  %91 = vmatprep.subr.mxu0 0.0
  %92 = vmatpush1.msra.mxu0 0.0
  %93 = vmatprep.subr.mxu0 0.0
  %94 = vmatpush1.msra.mxu0 0.0
  %95 = vmatprep.subr.mxu0 0.0
  %96 = vmatpush1.msra.mxu0 0.0
  %97 = vmatprep.mubr.f32.mxu0 0.0
  %98 = vmatmul.mubr.f32.gmra.mrb[0].mxu0 %v28
  %v99 = vpop.f32.mrb[0].mxu0
  %v100 = vadd.f32 %v25, %v99
  %v101 = vpop.f32.mrb[0].mxu0
  %102 = vmatprep.mubr.f32.mxu0 0.0
  %103 = vmatmul.mubr.f32.gmra.mrb[0].mxu0 %v31
  %v104 = vpop.f32.mrb[0].mxu0
  %v105 = vadd.f32 %v25, %v104
  %v106 = vpop.f32.mrb[0].mxu0
  %107 = vdwg.mxu0
  %v108 = vxor.u32 %v100, 2147483648
  %v109 = vxor.u32 %v105, 2147483648
  %v110 = vmul.f32 %v108, 1.442695
  %v111 = vpow.pop %v110
  %v112 = vmul.f32 %v109, 1.442695
  %v113 = vpow.pop %v112
  %v114 = vadd.f32 %v111, 1.0
  %v115 = vadd.f32 %v113, 1.0
  %v116 = vrcp.pop %v114
  %v117 = vmul.f32 1.0, %v116
  %v118 = vrcp.pop %v115
  %v119 = vmul.f32 1.0, %v118
  %v120 = vld [vmem:[%s3] sm:$0xff]
  %v121 = vld [vmem:[%s3 + $0x8] sm:$0xff]
  %v122 = vcvt.s32.f32 %v120
  %v123 = vcvt.s32.f32 %v121
  %v124 = vmul.f32 %v117, %v122
  %v125 = vmul.f32 %v119, %v123
  %vm126 = vcmask 7168
  %127 = vst.msk [vmem:[%s4] sm:$0xff] %vm126, %v124
  %128 = vst.msk [vmem:[%s4 + $0x8] sm:$0xff] %vm126, %v125
  // Predicated region
  $region18: #{tpu_custom_call.1} parent=0 // pred_check
    _
  $region19: #{tpu_custom_call.1} parent=0 // pred_check_branch
    %130 = sbr.rel (0) target = $region21
  $region20: #{tpu_custom_call.1} parent=0 // pred_region
    _
  $region21: #{tpu_custom_call.1} parent=0 // pred_fallthru
    _
  // Predicated region
  $region22: #{tpu_custom_call.1} parent=0 // pred_check
    _
  $region23: #{tpu_custom_call.1} parent=0 // pred_check_branch
    %132 = sbr.rel (0) target = $region25
  $region24: #{tpu_custom_call.1} parent=0 // pred_region
    _
  $region25: #{tpu_custom_call.1} parent=0 // pred_fallthru
    _

</llo_original>
